<compile_context>
chip_gen: v7x
topology: tpu7x:2x2x1
jax: 0.10.0
libtpu: 0.0.40
codegen_flags: <defaults>
</compile_context>

<pallas_src>
import jax
import jax.numpy as jnp
from jax import lax
from jax.experimental import pallas as pl
from jax.experimental.pallas import tpu as pltpu


def _round_up(v: int, m: int) -> int:
    return ((v + m - 1) // m) * m


def _pad_to(a, shape):
    pads = [(0, s - d) for d, s in zip(a.shape, shape)]
    if any(p[1] for p in pads):
        return jnp.pad(a, pads)
    return a


def cond_linear_kernel(x_ref, w_ref, b_ref, t_ref, e_ref, out_ref):
    # x_ref: (TB, K)   w_ref: (K, N)   b_ref: (1, N)
    # t_ref: (TB, 1) int32   e_ref: (S8, N)   out_ref: (TB, N)
    tb = x_ref.shape[0]
    s8 = e_ref.shape[0]

    # Linear: x @ W_kn + bias (plain NN matmul on the MXU, f32 accumulation).
    acc = jnp.dot(x_ref[...], w_ref[...], preferred_element_type=jnp.float32)
    acc = acc + b_ref[...]                                    # (TB, N) + (1, N)

    # Fused embedding gather: gamma = one_hot(t) @ embed_weight (exact, MXU;
    # padded embed rows are never selected because t < n_steps).
    step_ids = lax.broadcasted_iota(jnp.int32, (tb, s8), 1)
    onehot = (step_ids == t_ref[...]).astype(jnp.float32)     # (TB, S8)
    gamma = jnp.dot(onehot, e_ref[...],
                    preferred_element_type=jnp.float32)       # (TB, N)

    out_ref[...] = (gamma * acc).astype(out_ref.dtype)


def conditional_linear(x, t, weight, bias, embed_weight, *, block_b=512):
    """x: (B, num_in) f32; t: (B,) int; weight: (num_out, num_in);
    bias: (num_out,); embed_weight: (n_steps, num_out). Returns (B, num_out)."""
    B, num_in = x.shape
    num_out = weight.shape[0]
    n_steps = embed_weight.shape[0]

    K = num_in                        # contraction dim: full-extent block, no pad
    N = _round_up(num_out, 128)       # lane-dense output dim
    S8 = _round_up(n_steps, 8)        # sublane-only pad for the one-hot gather

    # Batch tiling: pad only to the 8-row sublane quantum; if the batch is big
    # enough, split into >= 2 tiles so the "parallel" axis can shard across
    # both TensorCores on v7x (at most 8 extra pad rows).
    Bp8 = _round_up(B, 8)
    TB = min(block_b, Bp8)
    if Bp8 // TB < 2 and Bp8 >= 16:
        TB = _round_up(pl.cdiv(Bp8, 2), 8)
    Bp = _round_up(Bp8, TB)
    grid = (Bp // TB,)

    x_p = _pad_to(x, (Bp, K))
    w_p = _pad_to(jnp.transpose(weight), (K, N))          # one-time (K, N) layout
    b_p = _pad_to(bias.reshape(1, num_out), (1, N))
    e_p = _pad_to(embed_weight, (S8, N))
    t_p = _pad_to(t.reshape(B, 1).astype(jnp.int32), (Bp, 1))

    # VMEM budget (f32): x/t/out double-buffered, resident operands single.
    itm = 4
    vmem_bytes = (
        2 * TB * K * itm          # x tiles (double buffered)
        + 2 * TB * 4              # t tiles
        + K * N * itm             # weight (single buffered)
        + N * itm                 # bias
        + S8 * N * itm            # embed table
        + 2 * TB * N * itm        # out tiles (double buffered)
        + 2 * TB * N * itm        # in-kernel f32 intermediates headroom
    )
    vmem_limit = int(min(max(vmem_bytes * 3 // 2 + (1 << 20), 16 << 20), 100 << 20))

    cost = pl.CostEstimate(
        flops=2 * Bp * K * N + 2 * Bp * S8 * N + 3 * Bp * N,
        transcendentals=0,
        bytes_accessed=itm * (Bp * K + K * N + N + S8 * N + Bp * N) + 4 * Bp,
    )
    cparams = pltpu.CompilerParams(
        dimension_semantics=("parallel",),     # megacore-shardable batch axis
        vmem_limit_bytes=vmem_limit,
    )

    def _call(single_buffer_residents: bool):
        res_kw = ({"pipeline_mode": pl.Buffered(1)}
                  if single_buffer_residents else {})
        return pl.pallas_call(
            cond_linear_kernel,
            out_shape=jax.ShapeDtypeStruct((Bp, N), x.dtype),
            grid=grid,
            in_specs=[
                pl.BlockSpec((TB, K), lambda i: (i, 0)),             # x: batch-tiled
                pl.BlockSpec((K, N), lambda i: (0, 0), **res_kw),    # weight: resident
                pl.BlockSpec((1, N), lambda i: (0, 0), **res_kw),    # bias: resident
                pl.BlockSpec((TB, 1), lambda i: (i, 0)),             # t: batch-tiled
                pl.BlockSpec((S8, N), lambda i: (0, 0), **res_kw),   # embed: resident
            ],
            out_specs=pl.BlockSpec((TB, N), lambda i: (i, 0)),
            compiler_params=cparams,
            cost_estimate=cost,
        )(x_p, w_p, b_p, t_p, e_p)

    try:
        out_p = _call(True)
    except Exception:
        # Fallback if this jax build rejects Buffered(1) on grid-invariant specs.
        out_p = _call(False)

    return out_p[:B, :num_out]


if __name__ == "__main__":
    # Small shapes consistent with the module's forward.
    B, num_in, num_out, n_steps = 8, 32, 64, 10

    key = jax.random.PRNGKey(0)
    kx, kt, kw, kb, ke = jax.random.split(key, 5)

    # Inputs
    x = jax.random.normal(kx, (B, num_in), dtype=jnp.float32)
    t = jax.random.randint(kt, (B,), 0, n_steps, dtype=jnp.int32)

    # Deterministic parameter init mirroring PyTorch defaults:
    #  nn.Linear: weight, bias ~ U(-1/sqrt(num_in), 1/sqrt(num_in))
    #  nn.Embedding with .uniform_(): weights ~ U(0, 1)
    bound = 1.0 / jnp.sqrt(jnp.float32(num_in))
    weight = jax.random.uniform(kw, (num_out, num_in), jnp.float32, -bound, bound)
    bias = jax.random.uniform(kb, (num_out,), jnp.float32, -bound, bound)
    embed_weight = jax.random.uniform(ke, (n_steps, num_out), jnp.float32, 0.0, 1.0)

    out = conditional_linear(x, t, weight, bias, embed_weight)
    out = jax.block_until_ready(out)

    # Pure-JAX reference check (same semantics as the PyTorch forward).
    ref = embed_weight[t] * (x @ weight.T + bias)
    assert out.shape == (B, num_out)
    assert jnp.allclose(out, ref, atol=1e-5, rtol=1e-5)

    print("KERNEL_OK")
</pallas_src>

<mosaic_0001>
module attributes {stable_mosaic.version = 11 : i64} {
  func.func @cond_linear_kernel(%arg0: i32, %arg1: memref<8x32xf32, #tpu.memory_space<vmem>>, %arg2: memref<32x128xf32, #tpu.memory_space<vmem>>, %arg3: memref<1x128xf32, #tpu.memory_space<vmem>>, %arg4: memref<8x1xi32, #tpu.memory_space<vmem>>, %arg5: memref<16x128xf32, #tpu.memory_space<vmem>>, %arg6: memref<8x128xf32, #tpu.memory_space<vmem>>) attributes {dimension_semantics = [#tpu.dimension_semantics<parallel>], iteration_bounds = array<i64: 1>, scalar_prefetch = 0 : i64, scratch_operands = 0 : i64, tpu.core_type = #tpu.core_type<tc>, window_params = [{transform_indices = @transform_0, window_bounds = array<i64: 8, 32>}, {pipeline_mode = #tpu.pipeline_mode<synchronous>, transform_indices = @transform_1, window_bounds = array<i64: 32, 128>}, {pipeline_mode = #tpu.pipeline_mode<synchronous>, transform_indices = @transform_2, window_bounds = array<i64: 1, 128>}, {transform_indices = @transform_3, window_bounds = array<i64: 8, 1>}, {pipeline_mode = #tpu.pipeline_mode<synchronous>, transform_indices = @transform_4, window_bounds = array<i64: 16, 128>}, {transform_indices = @transform_5, window_bounds = array<i64: 8, 128>}]} {
    %c0 = arith.constant 0 : index
    %c0_0 = arith.constant 0 : index
    %0 = vector.load %arg1[%c0, %c0_0] : memref<8x32xf32, #tpu.memory_space<vmem>>, vector<8x32xf32>
    %c0_1 = arith.constant 0 : index
    %c0_2 = arith.constant 0 : index
    %1 = vector.load %arg2[%c0_1, %c0_2] : memref<32x128xf32, #tpu.memory_space<vmem>>, vector<32x128xf32>
    %cst = arith.constant dense<0.000000e+00> : vector<8x128xf32>
    %2 = tpu.matmul %0, %1, %cst {dimension_numbers = #tpu.dot_dimension_numbers<[1], [0], [0], [1], [0, 0, 1, 1], [], []>} : vector<8x32xf32>, vector<32x128xf32>, vector<8x128xf32> -> vector<8x128xf32>
    %c0_3 = arith.constant 0 : index
    %c0_4 = arith.constant 0 : index
    %3 = vector.load %arg3[%c0_3, %c0_4] : memref<1x128xf32, #tpu.memory_space<vmem>>, vector<1x128xf32>
    %4 = vector.broadcast %3 : vector<1x128xf32> to vector<8x128xf32>
    %5 = arith.addf %2, %4 : vector<8x128xf32>
    %6 = tpu.iota {dimensions = array<i32: 1>} : vector<8x16xi32>
    %c0_5 = arith.constant 0 : index
    %c0_6 = arith.constant 0 : index
    %7 = vector.load %arg4[%c0_5, %c0_6] : memref<8x1xi32, #tpu.memory_space<vmem>>, vector<8x1xi32>
    %8 = vector.broadcast %7 : vector<8x1xi32> to vector<8x16xi32>
    %9 = arith.cmpi eq, %6, %8 : vector<8x16xi32>
    %10 = arith.extui %9 : vector<8x16xi1> to vector<8x16xi32>
    %11 = arith.sitofp %10 : vector<8x16xi32> to vector<8x16xf32>
    %c0_7 = arith.constant 0 : index
    %c0_8 = arith.constant 0 : index
    %12 = vector.load %arg5[%c0_7, %c0_8] : memref<16x128xf32, #tpu.memory_space<vmem>>, vector<16x128xf32>
    %cst_9 = arith.constant dense<0.000000e+00> : vector<8x128xf32>
    %13 = tpu.matmul %11, %12, %cst_9 {dimension_numbers = #tpu.dot_dimension_numbers<[1], [0], [0], [1], [0, 0, 1, 1], [], []>} : vector<8x16xf32>, vector<16x128xf32>, vector<8x128xf32> -> vector<8x128xf32>
    %14 = arith.mulf %13, %5 : vector<8x128xf32>
    %c0_10 = arith.constant 0 : index
    %c0_11 = arith.constant 0 : index
    %15 = vector.load %arg6[%c0_10, %c0_11] : memref<8x128xf32, #tpu.memory_space<vmem>>, vector<8x128xf32>
    tpu.vector_store %arg6[%c0_10, %c0_11], %14 {strides = array<i32>} : memref<8x128xf32, #tpu.memory_space<vmem>>, vector<8x128xf32>,
    return
  }
  func.func @transform_0(%arg0: i32) -> (i32, i32) {
    %c0_i32 = arith.constant 0 : i32
    %c0_i32_0 = arith.constant 0 : i32
    return %arg0, %c0_i32 : i32, i32
  }
  func.func @transform_1(%arg0: i32) -> (i32, i32) {
    %c0_i32 = arith.constant 0 : i32
    %c0_i32_0 = arith.constant 0 : i32
    %c0_i32_1 = arith.constant 0 : i32
    return %c0_i32, %c0_i32_0 : i32, i32
  }
  func.func @transform_2(%arg0: i32) -> (i32, i32) {
    %c0_i32 = arith.constant 0 : i32
    %c0_i32_0 = arith.constant 0 : i32
    %c0_i32_1 = arith.constant 0 : i32
    return %c0_i32, %c0_i32_0 : i32, i32
  }
  func.func @transform_3(%arg0: i32) -> (i32, i32) {
    %c0_i32 = arith.constant 0 : i32
    %c0_i32_0 = arith.constant 0 : i32
    return %arg0, %c0_i32 : i32, i32
  }
  func.func @transform_4(%arg0: i32) -> (i32, i32) {
    %c0_i32 = arith.constant 0 : i32
    %c0_i32_0 = arith.constant 0 : i32
    %c0_i32_1 = arith.constant 0 : i32
    return %c0_i32, %c0_i32_0 : i32, i32
  }
  func.func @transform_5(%arg0: i32) -> (i32, i32) {
    %c0_i32 = arith.constant 0 : i32
    %c0_i32_0 = arith.constant 0 : i32
    return %arg0, %c0_i32 : i32, i32
  }
}

module attributes {stable_mosaic.version = 11 : i64} {
  func.func @cond_linear_kernel(%arg0: i32, %arg1: memref<8x32xf32, #tpu.memory_space<vmem>>, %arg2: memref<32x128xf32, #tpu.memory_space<vmem>>, %arg3: memref<1x128xf32, #tpu.memory_space<vmem>>, %arg4: memref<8x1xi32, #tpu.memory_space<vmem>>, %arg5: memref<16x128xf32, #tpu.memory_space<vmem>>, %arg6: memref<8x128xf32, #tpu.memory_space<vmem>>) attributes {dimension_semantics = [#tpu.dimension_semantics<parallel>], iteration_bounds = array<i64: 1>, scalar_prefetch = 0 : i64, scratch_operands = 0 : i64, tpu.core_type = #tpu.core_type<tc>, window_params = [{transform_indices = @transform_0, window_bounds = array<i64: 8, 32>}, {pipeline_mode = #tpu.pipeline_mode<synchronous>, transform_indices = @transform_1, window_bounds = array<i64: 32, 128>}, {pipeline_mode = #tpu.pipeline_mode<synchronous>, transform_indices = @transform_2, window_bounds = array<i64: 1, 128>}, {transform_indices = @transform_3, window_bounds = array<i64: 8, 1>}, {pipeline_mode = #tpu.pipeline_mode<synchronous>, transform_indices = @transform_4, window_bounds = array<i64: 16, 128>}, {transform_indices = @transform_5, window_bounds = array<i64: 8, 128>}]} {
    %c0 = arith.constant 0 : index
    %c0_0 = arith.constant 0 : index
    %0 = vector.load %arg1[%c0, %c0_0] : memref<8x32xf32, #tpu.memory_space<vmem>>, vector<8x32xf32>
    %c0_1 = arith.constant 0 : index
    %c0_2 = arith.constant 0 : index
    %1 = vector.load %arg2[%c0_1, %c0_2] : memref<32x128xf32, #tpu.memory_space<vmem>>, vector<32x128xf32>
    %cst = arith.constant dense<0.000000e+00> : vector<8x128xf32>
    %2 = tpu.matmul %0, %1, %cst {dimension_numbers = #tpu.dot_dimension_numbers<[1], [0], [0], [1], [0, 0, 1, 1], [], []>} : vector<8x32xf32>, vector<32x128xf32>, vector<8x128xf32> -> vector<8x128xf32>
    %c0_3 = arith.constant 0 : index
    %c0_4 = arith.constant 0 : index
    %3 = vector.load %arg3[%c0_3, %c0_4] : memref<1x128xf32, #tpu.memory_space<vmem>>, vector<1x128xf32>
    %4 = vector.broadcast %3 : vector<1x128xf32> to vector<8x128xf32>
    %5 = arith.addf %2, %4 : vector<8x128xf32>
    %6 = tpu.iota {dimensions = array<i32: 1>} : vector<8x16xi32>
    %c0_5 = arith.constant 0 : index
    %c0_6 = arith.constant 0 : index
    %7 = vector.load %arg4[%c0_5, %c0_6] : memref<8x1xi32, #tpu.memory_space<vmem>>, vector<8x1xi32>
    %8 = vector.broadcast %7 : vector<8x1xi32> to vector<8x16xi32>
    %9 = arith.cmpi eq, %6, %8 : vector<8x16xi32>
    %10 = arith.extui %9 : vector<8x16xi1> to vector<8x16xi32>
    %11 = arith.sitofp %10 : vector<8x16xi32> to vector<8x16xf32>
    %c0_7 = arith.constant 0 : index
    %c0_8 = arith.constant 0 : index
    %12 = vector.load %arg5[%c0_7, %c0_8] : memref<16x128xf32, #tpu.memory_space<vmem>>, vector<16x128xf32>
    %cst_9 = arith.constant dense<0.000000e+00> : vector<8x128xf32>
    %13 = tpu.matmul %11, %12, %cst_9 {dimension_numbers = #tpu.dot_dimension_numbers<[1], [0], [0], [1], [0, 0, 1, 1], [], []>} : vector<8x16xf32>, vector<16x128xf32>, vector<8x128xf32> -> vector<8x128xf32>
    %14 = arith.mulf %13, %5 : vector<8x128xf32>
    %c0_10 = arith.constant 0 : index
    %c0_11 = arith.constant 0 : index
    %15 = vector.load %arg6[%c0_10, %c0_11] : memref<8x128xf32, #tpu.memory_space<vmem>>, vector<8x128xf32>
    tpu.vector_store %arg6[%c0_10, %c0_11], %14 {strides = array<i32>} : memref<8x128xf32, #tpu.memory_space<vmem>>, vector<8x128xf32>,
    return
  }
  func.func @transform_0(%arg0: i32) -> (i32, i32) {
    %c0_i32 = arith.constant 0 : i32
    %c0_i32_0 = arith.constant 0 : i32
    return %arg0, %c0_i32 : i32, i32
  }
  func.func @transform_1(%arg0: i32) -> (i32, i32) {
    %c0_i32 = arith.constant 0 : i32
    %c0_i32_0 = arith.constant 0 : i32
    %c0_i32_1 = arith.constant 0 : i32
    return %c0_i32, %c0_i32_0 : i32, i32
  }
  func.func @transform_2(%arg0: i32) -> (i32, i32) {
    %c0_i32 = arith.constant 0 : i32
    %c0_i32_0 = arith.constant 0 : i32
    %c0_i32_1 = arith.constant 0 : i32
    return %c0_i32, %c0_i32_0 : i32, i32
  }
  func.func @transform_3(%arg0: i32) -> (i32, i32) {
    %c0_i32 = arith.constant 0 : i32
    %c0_i32_0 = arith.constant 0 : i32
    return %arg0, %c0_i32 : i32, i32
  }
  func.func @transform_4(%arg0: i32) -> (i32, i32) {
    %c0_i32 = arith.constant 0 : i32
    %c0_i32_0 = arith.constant 0 : i32
    %c0_i32_1 = arith.constant 0 : i32
    return %c0_i32, %c0_i32_0 : i32, i32
  }
  func.func @transform_5(%arg0: i32) -> (i32, i32) {
    %c0_i32 = arith.constant 0 : i32
    %c0_i32_0 = arith.constant 0 : i32
    return %arg0, %c0_i32 : i32, i32
  }
}

</mosaic_0001>

<llo_original>
// kernel: tpu_custom_call.1
$region0: #{tpu_custom_call.1}
  #allocation0 [shape = 'u32[]', space=smem, size = 0x4, offset = 0x4, fixed_abs, tag = 'smem constant byte address 0x4 - core index']
  #allocation1 [shape = 'u32[144,128]{1,0:T(1,128)}', space=vmem, size = 0x12000, scoped, tag = 'internal scratch']
  %s0 = inlined_call_operand.vmem [shape: f32[8,32], index: 0, kind: input, shape index: {}]
  %s1 = inlined_call_operand.hbm [shape: f32[32,128], index: 1, kind: input, shape index: {}]
  %s2 = inlined_call_operand.hbm [shape: f32[1,128], index: 2, kind: input, shape index: {}]
  %s3 = inlined_call_operand.vmem [shape: s32[8,1], index: 3, kind: input, shape index: {}]
  %s4 = inlined_call_operand.vmem [shape: f32[16,128], index: 4, kind: input, shape index: {}]
  %s5 = inlined_call_operand.hbm [shape: f32[8,128], index: 5, kind: output, shape index: {}]
  %s6 = sld [smem:[#allocation0]]
  $region38: #{tpu_custom_call.1} parent=0
    _
  %s8 = ssub.s32 1, %s6
  %s9 = scalar_select 0, %s8, %s6
  $region1: #{tpu_custom_call.1} parent=0
    #allocation2 [shape = 'u8[16384]{0}', space=vmem, size = 0x4000, scoped, tag = 'input window, operand 1, single buffered']
    #allocation3 [shape = 's32[1]{0}', space=sflag, size = 0x4, scoped, tag = 'scoped memory for tpu_custom_call.1']
    #allocation4 [shape = 's32[1]{0}', space=sflag, size = 0x4, scoped, tag = 'scoped memory for tpu_custom_call.1']
    #allocation5 [shape = 'u8[512]{0}', space=vmem, size = 0x400, scoped, tag = 'input window, operand 2, single buffered']
    #allocation6 [shape = 's32[1]{0}', space=sflag, size = 0x4, scoped, tag = 'scoped memory for tpu_custom_call.1']
    #allocation7 [shape = 'u8[4096]{0}', space=vmem, size = 0x1000, scoped, tag = 'output window, operand 0, single buffered']
    %10 = vsyncpa [#allocation3], 0
    %11 = vsyncpa [#allocation6], 0
    %12 = vsyncpa [#allocation4], 0
    // Predicated region
    $region2: #{tpu_custom_call.1} parent=1 // pred_check
      _
    $region3: #{tpu_custom_call.1} parent=1 // pred_check_branch
      %14 = sbr.rel (0) target = $region5
    $region4: #{tpu_custom_call.1} parent=1 // pred_region
      _
    $region5: #{tpu_custom_call.1} parent=1 // pred_fallthru
      _
    // Predicated region
    $region6: #{tpu_custom_call.1} parent=1 // pred_check
      _
    $region7: #{tpu_custom_call.1} parent=1 // pred_check_branch
      %16 = sbr.rel (0) target = $region9
    $region8: #{tpu_custom_call.1} parent=1 // pred_region
      %s18 = ssub.s32 512, 512
      %19 = vsyncadd [#allocation3], %s18
      %s20 = sshll.u32 [#allocation2], 4
      %s21 = int_to_ptr.vmem [resolvable:$true] %s20
      %26 = dma.hbm_to_vmem [thread:$0]  %s1, 512, %s21, [#allocation3], 128, 128, 8
    $region9: #{tpu_custom_call.1} parent=1 // pred_fallthru
      _
    // Predicated region
    $region10: #{tpu_custom_call.1} parent=1 // pred_check
      _
    $region11: #{tpu_custom_call.1} parent=1 // pred_check_branch
      %28 = sbr.rel (0) target = $region13
    $region12: #{tpu_custom_call.1} parent=1 // pred_region
      %s30 = ssub.s32 16, 16
      %31 = vsyncadd [#allocation6], %s30
      %s33 = sshll.u32 [#allocation5], 4
      %s34 = int_to_ptr.vmem [resolvable:$true] %s33
      %36 = dma.hbm_to_vmem [thread:$0]  %s2, 16, %s34, [#allocation6]
    $region13: #{tpu_custom_call.1} parent=1 // pred_fallthru
      _
    // Predicated region
    $region14: #{tpu_custom_call.1} parent=1 // pred_check
      _
    $region15: #{tpu_custom_call.1} parent=1 // pred_check_branch
      %38 = sbr.rel (0) target = $region17
    $region16: #{tpu_custom_call.1} parent=1 // pred_region
      _
    $region17: #{tpu_custom_call.1} parent=1 // pred_fallthru
      _
    // Predicated region
    $region18: #{tpu_custom_call.1} parent=1 // pred_check
      _
    $region19: #{tpu_custom_call.1} parent=1 // pred_check_branch
      %40 = sbr.rel (0) target = $region21
    $region20: #{tpu_custom_call.1} parent=1 // pred_region
      _
    $region21: #{tpu_custom_call.1} parent=1 // pred_fallthru
      _
    // Predicated region
    $region22: #{tpu_custom_call.1} parent=1 // pred_check
      _
    $region23: #{tpu_custom_call.1} parent=1 // pred_check_branch
      %42 = sbr.rel (0) target = $region25
    $region24: #{tpu_custom_call.1} parent=1 // pred_region
      %43 = dma.done [#allocation3], 512
    $region25: #{tpu_custom_call.1} parent=1 // pred_fallthru
      _
    // Predicated region
    $region26: #{tpu_custom_call.1} parent=1 // pred_check
      _
    $region27: #{tpu_custom_call.1} parent=1 // pred_check_branch
      %45 = sbr.rel (0) target = $region29
    $region28: #{tpu_custom_call.1} parent=1 // pred_region
      %46 = dma.done [#allocation6], 16
    $region29: #{tpu_custom_call.1} parent=1 // pred_fallthru
      _
    %v47 = vld [vmem:[%s0] sm:$0xff]
    %v48 = vld [vmem:[#allocation2] sm:$0xff]
    %v49 = vld [vmem:[#allocation2 + $0x8] sm:$0xff]
    %v50 = vld [vmem:[#allocation2 + $0x10] sm:$0xff]
    %v51 = vld [vmem:[#allocation2 + $0x18] sm:$0xff]
    %v52 = vld [vmem:[#allocation5] sm:$0x1]
    %v54 = vlaneseq
    %v55 = vshrl.u32 %v54, 7
    %v56 = vsub.s32 0, %v55
    %v57 = vrot.slane %v52, %v56
    %vm59 = vcmask 261120
    %v61 = vsel %vm59, %v47, 0
    %63 = vmatprep.subr.mxu0 0.0
    %64 = vmatpush1.msra.mxu0 %v48
    %65 = vmatprep.subr.mxu0 0.0
    %66 = vmatpush1.msra.mxu0 %v49
    %67 = vmatprep.subr.mxu0 0.0
    %68 = vmatpush1.msra.mxu0 %v50
    %69 = vmatprep.subr.mxu0 0.0
    %70 = vmatpush1.msra.mxu0 %v51
    %71 = vmatprep.subr.mxu0 0.0
    %72 = vmatpush1.msra.mxu0 0.0
    %73 = vmatprep.subr.mxu0 0.0
    %74 = vmatpush1.msra.mxu0 0.0
    %75 = vmatprep.subr.mxu0 0.0
    %76 = vmatpush1.msra.mxu0 0.0
    %77 = vmatprep.subr.mxu0 0.0
    %78 = vmatpush1.msra.mxu0 0.0
    %79 = vmatprep.subr.mxu0 0.0
    %80 = vmatpush1.msra.mxu0 0.0
    %81 = vmatprep.subr.mxu0 0.0
    %82 = vmatpush1.msra.mxu0 0.0
    %83 = vmatprep.subr.mxu0 0.0
    %84 = vmatpush1.msra.mxu0 0.0
    %85 = vmatprep.subr.mxu0 0.0
    %86 = vmatpush1.msra.mxu0 0.0
    %87 = vmatprep.subr.mxu0 0.0
    %88 = vmatpush1.msra.mxu0 0.0
    %89 = vmatprep.subr.mxu0 0.0
    %90 = vmatpush1.msra.mxu0 0.0
    %91 = vmatprep.subr.mxu0 0.0
    %92 = vmatpush1.msra.mxu0 0.0
    %93 = vmatprep.subr.mxu0 0.0
    %94 = vmatpush1.msra.mxu0 0.0
    %95 = vmatprep.subr.mxu0 0.0
    %96 = vmatpush1.msra.mxu0 0.0
    %97 = vmatprep.subr.mxu0 0.0
    %98 = vmatpush1.msra.mxu0 0.0
    %99 = vmatprep.subr.mxu0 0.0
    %100 = vmatpush1.msra.mxu0 0.0
    %101 = vmatprep.subr.mxu0 0.0
    %102 = vmatpush1.msra.mxu0 0.0
    %103 = vmatprep.subr.mxu0 0.0
    %104 = vmatpush1.msra.mxu0 0.0
    %105 = vmatprep.subr.mxu0 0.0
    %106 = vmatpush1.msra.mxu0 0.0
    %107 = vmatprep.subr.mxu0 0.0
    %108 = vmatpush1.msra.mxu0 0.0
    %109 = vmatprep.subr.mxu0 0.0
    %110 = vmatpush1.msra.mxu0 0.0
    %111 = vmatprep.subr.mxu0 0.0
    %112 = vmatpush1.msra.mxu0 0.0
    %113 = vmatprep.subr.mxu0 0.0
    %114 = vmatpush1.msra.mxu0 0.0
    %115 = vmatprep.subr.mxu0 0.0
    %116 = vmatpush1.msra.mxu0 0.0
    %117 = vmatprep.subr.mxu0 0.0
    %118 = vmatpush1.msra.mxu0 0.0
    %119 = vmatprep.subr.mxu0 0.0
    %120 = vmatpush1.msra.mxu0 0.0
    %121 = vmatprep.subr.mxu0 0.0
    %122 = vmatpush1.msra.mxu0 0.0
    %123 = vmatprep.subr.mxu0 0.0
    %124 = vmatpush1.msra.mxu0 0.0
    %125 = vmatprep.subr.mxu0 0.0
    %126 = vmatpush1.msra.mxu0 0.0
    %127 = vmatprep.mubr.f32.mxu0 0.0
    %128 = vmatmul.mubr.f32.gmra.mrb[0].mxu0 %v61
    %v129 = vpop.f32.mrb[0].mxu0
    %v130 = vadd.f32 %v57, %v129
    %v131 = vpop.f32.mrb[0].mxu0
    %132 = vdwg.mxu0
    %v133 = vlaneseq
    %v134 = vand.u32 %v133, 127
    %v135 = vld [vmem:[%s3] sm:$0xff]
    %136 = vset.pattern.permute.xlu0 0
    %137 = vperm.xlu0 %136, %v135
    %v138 = vpop.permute.xlu0 %137
    %vm139 = vcmp.eq.s32.totalorder %v134, %v138
    %v140 = vsel %vm139, 1, 0
    %v141 = vcvt.s32.f32 %v140
    %v142 = vld [vmem:[%s4] sm:$0xff]
    %v143 = vld [vmem:[%s4 + $0x8] sm:$0xff]
    %vm144 = vcmask 130048
    %v146 = vsel %vm144, %v141, 0
    %148 = vmatprep.subr.mxu0 0.0
    %149 = vmatpush1.msra.mxu0 %v142
    %150 = vmatprep.subr.mxu0 0.0
    %151 = vmatpush1.msra.mxu0 %v143
    %152 = vmatprep.subr.mxu0 0.0
    %153 = vmatpush1.msra.mxu0 0.0
    %154 = vmatprep.subr.mxu0 0.0
    %155 = vmatpush1.msra.mxu0 0.0
    %156 = vmatprep.subr.mxu0 0.0
    %157 = vmatpush1.msra.mxu0 0.0
    %158 = vmatprep.subr.mxu0 0.0
    %159 = vmatpush1.msra.mxu0 0.0
    %160 = vmatprep.subr.mxu0 0.0
    %161 = vmatpush1.msra.mxu0 0.0
    %162 = vmatprep.subr.mxu0 0.0
    %163 = vmatpush1.msra.mxu0 0.0
    %164 = vmatprep.subr.mxu0 0.0
    %165 = vmatpush1.msra.mxu0 0.0
    %166 = vmatprep.subr.mxu0 0.0
    %167 = vmatpush1.msra.mxu0 0.0
    %168 = vmatprep.subr.mxu0 0.0
    %169 = vmatpush1.msra.mxu0 0.0
    %170 = vmatprep.subr.mxu0 0.0
    %171 = vmatpush1.msra.mxu0 0.0
    %172 = vmatprep.subr.mxu0 0.0
    %173 = vmatpush1.msra.mxu0 0.0
    %174 = vmatprep.subr.mxu0 0.0
    %175 = vmatpush1.msra.mxu0 0.0
    %176 = vmatprep.subr.mxu0 0.0
    %177 = vmatpush1.msra.mxu0 0.0
    %178 = vmatprep.subr.mxu0 0.0
    %179 = vmatpush1.msra.mxu0 0.0
    %180 = vmatprep.subr.mxu0 0.0
    %181 = vmatpush1.msra.mxu0 0.0
    %182 = vmatprep.subr.mxu0 0.0
    %183 = vmatpush1.msra.mxu0 0.0
    %184 = vmatprep.subr.mxu0 0.0
    %185 = vmatpush1.msra.mxu0 0.0
    %186 = vmatprep.subr.mxu0 0.0
    %187 = vmatpush1.msra.mxu0 0.0
    %188 = vmatprep.subr.mxu0 0.0
    %189 = vmatpush1.msra.mxu0 0.0
    %190 = vmatprep.subr.mxu0 0.0
    %191 = vmatpush1.msra.mxu0 0.0
    %192 = vmatprep.subr.mxu0 0.0
    %193 = vmatpush1.msra.mxu0 0.0
    %194 = vmatprep.subr.mxu0 0.0
    %195 = vmatpush1.msra.mxu0 0.0
    %196 = vmatprep.subr.mxu0 0.0
    %197 = vmatpush1.msra.mxu0 0.0
    %198 = vmatprep.subr.mxu0 0.0
    %199 = vmatpush1.msra.mxu0 0.0
    %200 = vmatprep.subr.mxu0 0.0
    %201 = vmatpush1.msra.mxu0 0.0
    %202 = vmatprep.subr.mxu0 0.0
    %203 = vmatpush1.msra.mxu0 0.0
    %204 = vmatprep.subr.mxu0 0.0
    %205 = vmatpush1.msra.mxu0 0.0
    %206 = vmatprep.subr.mxu0 0.0
    %207 = vmatpush1.msra.mxu0 0.0
    %208 = vmatprep.subr.mxu0 0.0
    %209 = vmatpush1.msra.mxu0 0.0
    %210 = vmatprep.subr.mxu0 0.0
    %211 = vmatpush1.msra.mxu0 0.0
    %212 = vmatprep.mubr.f32.mxu0 0.0
    %213 = vmatmul.mubr.f32.gmra.mrb[0].mxu0 %v146
    %v214 = vpop.f32.mrb[0].mxu0
    %v215 = vadd.f32 0.0, %v214
    %v216 = vpop.f32.mrb[0].mxu0
    %217 = vdwg.mxu0
    %v218 = vmul.f32 %v215, %v130
    %219 = vst [vmem:[#allocation7] sm:$0xff] %v218
    // Predicated region
    $region30: #{tpu_custom_call.1} parent=1 // pred_check
      _
    $region31: #{tpu_custom_call.1} parent=1 // pred_check_branch
      %221 = sbr.rel (0) target = $region33
    $region32: #{tpu_custom_call.1} parent=1 // pred_region
      %s223 = ssub.s32 128, 128
      %224 = vsyncadd [#allocation4], %s223
      %s226 = sshll.u32 [#allocation7], 4
      %s227 = int_to_ptr.vmem [resolvable:$true] %s226
      %229 = dma.vmem_to_hbm [thread:$0]  %s227, 128, %s5, [#allocation4]
    $region33: #{tpu_custom_call.1} parent=1 // pred_fallthru
      _
    // Predicated region
    $region34: #{tpu_custom_call.1} parent=1 // pred_check
      _
    $region35: #{tpu_custom_call.1} parent=1 // pred_check_branch
      %231 = sbr.rel (0) target = $region37
    $region36: #{tpu_custom_call.1} parent=1 // pred_region
      %232 = dma.done [#allocation4], 128
    $region37: #{tpu_custom_call.1} parent=1 // pred_fallthru
      _
    %233 = vsyncpa [#allocation3], 1
    %234 = vsyncpa [#allocation6], 1
    %235 = vsyncpa [#allocation4], 1

// kernel: tpu_custom_call.1
$region0: #{tpu_custom_call.1}
  #allocation0 [shape = 'u32[]', space=smem, size = 0x4, offset = 0x4, fixed_abs, tag = 'smem constant byte address 0x4 - core index']
  #allocation1 [shape = 'u32[144,128]{1,0:T(1,128)}', space=vmem, size = 0x12000, scoped, tag = 'internal scratch']
  %s0 = inlined_call_operand.vmem [shape: f32[8,32], index: 0, kind: input, shape index: {}]
  %s1 = inlined_call_operand.hbm [shape: f32[32,128], index: 1, kind: input, shape index: {}]
  %s2 = inlined_call_operand.hbm [shape: f32[1,128], index: 2, kind: input, shape index: {}]
  %s3 = inlined_call_operand.vmem [shape: s32[8,1], index: 3, kind: input, shape index: {}]
  %s4 = inlined_call_operand.vmem [shape: f32[16,128], index: 4, kind: input, shape index: {}]
  %s5 = inlined_call_operand.hbm [shape: f32[8,128], index: 5, kind: output, shape index: {}]
  %s6 = sld [smem:[#allocation0]]
  $region38: #{tpu_custom_call.1} parent=0
    _
  %s8 = ssub.s32 1, %s6
  %s9 = scalar_select 0, %s8, %s6
  $region1: #{tpu_custom_call.1} parent=0
    #allocation2 [shape = 'u8[16384]{0}', space=vmem, size = 0x4000, scoped, tag = 'input window, operand 1, single buffered']
    #allocation3 [shape = 's32[1]{0}', space=sflag, size = 0x4, scoped, tag = 'scoped memory for tpu_custom_call.1']
    #allocation4 [shape = 's32[1]{0}', space=sflag, size = 0x4, scoped, tag = 'scoped memory for tpu_custom_call.1']
    #allocation5 [shape = 'u8[512]{0}', space=vmem, size = 0x400, scoped, tag = 'input window, operand 2, single buffered']
    #allocation6 [shape = 's32[1]{0}', space=sflag, size = 0x4, scoped, tag = 'scoped memory for tpu_custom_call.1']
    #allocation7 [shape = 'u8[4096]{0}', space=vmem, size = 0x1000, scoped, tag = 'output window, operand 0, single buffered']
    %10 = vsyncpa [#allocation3], 0
    %11 = vsyncpa [#allocation6], 0
    %12 = vsyncpa [#allocation4], 0
    // Predicated region
    $region2: #{tpu_custom_call.1} parent=1 // pred_check
      _
    $region3: #{tpu_custom_call.1} parent=1 // pred_check_branch
      %14 = sbr.rel (0) target = $region5
    $region4: #{tpu_custom_call.1} parent=1 // pred_region
      _
    $region5: #{tpu_custom_call.1} parent=1 // pred_fallthru
      _
    // Predicated region
    $region6: #{tpu_custom_call.1} parent=1 // pred_check
      _
    $region7: #{tpu_custom_call.1} parent=1 // pred_check_branch
      %16 = sbr.rel (0) target = $region9
    $region8: #{tpu_custom_call.1} parent=1 // pred_region
      %s18 = ssub.s32 512, 512
      %19 = vsyncadd [#allocation3], %s18
      %s20 = sshll.u32 [#allocation2], 4
      %s21 = int_to_ptr.vmem [resolvable:$true] %s20
      %26 = dma.hbm_to_vmem [thread:$0]  %s1, 512, %s21, [#allocation3], 128, 128, 8
    $region9: #{tpu_custom_call.1} parent=1 // pred_fallthru
      _
    // Predicated region
    $region10: #{tpu_custom_call.1} parent=1 // pred_check
      _
    $region11: #{tpu_custom_call.1} parent=1 // pred_check_branch
      %28 = sbr.rel (0) target = $region13
    $region12: #{tpu_custom_call.1} parent=1 // pred_region
      %s30 = ssub.s32 16, 16
      %31 = vsyncadd [#allocation6], %s30
      %s33 = sshll.u32 [#allocation5], 4
      %s34 = int_to_ptr.vmem [resolvable:$true] %s33
      %36 = dma.hbm_to_vmem [thread:$0]  %s2, 16, %s34, [#allocation6]
    $region13: #{tpu_custom_call.1} parent=1 // pred_fallthru
      _
    // Predicated region
    $region14: #{tpu_custom_call.1} parent=1 // pred_check
      _
    $region15: #{tpu_custom_call.1} parent=1 // pred_check_branch
      %38 = sbr.rel (0) target = $region17
    $region16: #{tpu_custom_call.1} parent=1 // pred_region
      _
    $region17: #{tpu_custom_call.1} parent=1 // pred_fallthru
      _
    // Predicated region
    $region18: #{tpu_custom_call.1} parent=1 // pred_check
      _
    $region19: #{tpu_custom_call.1} parent=1 // pred_check_branch
      %40 = sbr.rel (0) target = $region21
    $region20: #{tpu_custom_call.1} parent=1 // pred_region
      _
    $region21: #{tpu_custom_call.1} parent=1 // pred_fallthru
      _
    // Predicated region
    $region22: #{tpu_custom_call.1} parent=1 // pred_check
      _
    $region23: #{tpu_custom_call.1} parent=1 // pred_check_branch
      %42 = sbr.rel (0) target = $region25
    $region24: #{tpu_custom_call.1} parent=1 // pred_region
      %43 = dma.done [#allocation3], 512
    $region25: #{tpu_custom_call.1} parent=1 // pred_fallthru
      _
    // Predicated region
    $region26: #{tpu_custom_call.1} parent=1 // pred_check
      _
    $region27: #{tpu_custom_call.1} parent=1 // pred_check_branch
      %45 = sbr.rel (0) target = $region29
    $region28: #{tpu_custom_call.1} parent=1 // pred_region
      %46 = dma.done [#allocation6], 16
    $region29: #{tpu_custom_call.1} parent=1 // pred_fallthru
      _
    %v47 = vld [vmem:[%s0] sm:$0xff]
    %v48 = vld [vmem:[#allocation2] sm:$0xff]
    %v49 = vld [vmem:[#allocation2 + $0x8] sm:$0xff]
    %v50 = vld [vmem:[#allocation2 + $0x10] sm:$0xff]
    %v51 = vld [vmem:[#allocation2 + $0x18] sm:$0xff]
    %v52 = vld [vmem:[#allocation5] sm:$0x1]
    %v54 = vlaneseq
    %v55 = vshrl.u32 %v54, 7
    %v56 = vsub.s32 0, %v55
    %v57 = vrot.slane %v52, %v56
    %vm59 = vcmask 261120
    %v61 = vsel %vm59, %v47, 0
    %63 = vmatprep.subr.mxu0 0.0
    %64 = vmatpush1.msra.mxu0 %v48
    %65 = vmatprep.subr.mxu0 0.0
    %66 = vmatpush1.msra.mxu0 %v49
    %67 = vmatprep.subr.mxu0 0.0
    %68 = vmatpush1.msra.mxu0 %v50
    %69 = vmatprep.subr.mxu0 0.0
    %70 = vmatpush1.msra.mxu0 %v51
    %71 = vmatprep.subr.mxu0 0.0
    %72 = vmatpush1.msra.mxu0 0.0
    %73 = vmatprep.subr.mxu0 0.0
    %74 = vmatpush1.msra.mxu0 0.0
    %75 = vmatprep.subr.mxu0 0.0
    %76 = vmatpush1.msra.mxu0 0.0
    %77 = vmatprep.subr.mxu0 0.0
    %78 = vmatpush1.msra.mxu0 0.0
    %79 = vmatprep.subr.mxu0 0.0
    %80 = vmatpush1.msra.mxu0 0.0
    %81 = vmatprep.subr.mxu0 0.0
    %82 = vmatpush1.msra.mxu0 0.0
    %83 = vmatprep.subr.mxu0 0.0
    %84 = vmatpush1.msra.mxu0 0.0
    %85 = vmatprep.subr.mxu0 0.0
    %86 = vmatpush1.msra.mxu0 0.0
    %87 = vmatprep.subr.mxu0 0.0
    %88 = vmatpush1.msra.mxu0 0.0
    %89 = vmatprep.subr.mxu0 0.0
    %90 = vmatpush1.msra.mxu0 0.0
    %91 = vmatprep.subr.mxu0 0.0
    %92 = vmatpush1.msra.mxu0 0.0
    %93 = vmatprep.subr.mxu0 0.0
    %94 = vmatpush1.msra.mxu0 0.0
    %95 = vmatprep.subr.mxu0 0.0
    %96 = vmatpush1.msra.mxu0 0.0
    %97 = vmatprep.subr.mxu0 0.0
    %98 = vmatpush1.msra.mxu0 0.0
    %99 = vmatprep.subr.mxu0 0.0
    %100 = vmatpush1.msra.mxu0 0.0
    %101 = vmatprep.subr.mxu0 0.0
    %102 = vmatpush1.msra.mxu0 0.0
    %103 = vmatprep.subr.mxu0 0.0
    %104 = vmatpush1.msra.mxu0 0.0
    %105 = vmatprep.subr.mxu0 0.0
    %106 = vmatpush1.msra.mxu0 0.0
    %107 = vmatprep.subr.mxu0 0.0
    %108 = vmatpush1.msra.mxu0 0.0
    %109 = vmatprep.subr.mxu0 0.0
    %110 = vmatpush1.msra.mxu0 0.0
    %111 = vmatprep.subr.mxu0 0.0
    %112 = vmatpush1.msra.mxu0 0.0
    %113 = vmatprep.subr.mxu0 0.0
    %114 = vmatpush1.msra.mxu0 0.0
    %115 = vmatprep.subr.mxu0 0.0
    %116 = vmatpush1.msra.mxu0 0.0
    %117 = vmatprep.subr.mxu0 0.0
    %118 = vmatpush1.msra.mxu0 0.0
    %119 = vmatprep.subr.mxu0 0.0
    %120 = vmatpush1.msra.mxu0 0.0
    %121 = vmatprep.subr.mxu0 0.0
    %122 = vmatpush1.msra.mxu0 0.0
    %123 = vmatprep.subr.mxu0 0.0
    %124 = vmatpush1.msra.mxu0 0.0
    %125 = vmatprep.subr.mxu0 0.0
    %126 = vmatpush1.msra.mxu0 0.0
    %127 = vmatprep.mubr.f32.mxu0 0.0
    %128 = vmatmul.mubr.f32.gmra.mrb[0].mxu0 %v61
    %v129 = vpop.f32.mrb[0].mxu0
    %v130 = vadd.f32 %v57, %v129
    %v131 = vpop.f32.mrb[0].mxu0
    %132 = vdwg.mxu0
    %v133 = vlaneseq
    %v134 = vand.u32 %v133, 127
    %v135 = vld [vmem:[%s3] sm:$0xff]
    %136 = vset.pattern.permute.xlu0 0
    %137 = vperm.xlu0 %136, %v135
    %v138 = vpop.permute.xlu0 %137
    %vm139 = vcmp.eq.s32.totalorder %v134, %v138
    %v140 = vsel %vm139, 1, 0
    %v141 = vcvt.s32.f32 %v140
    %v142 = vld [vmem:[%s4] sm:$0xff]
    %v143 = vld [vmem:[%s4 + $0x8] sm:$0xff]
    %vm144 = vcmask 130048
    %v146 = vsel %vm144, %v141, 0
    %148 = vmatprep.subr.mxu0 0.0
    %149 = vmatpush1.msra.mxu0 %v142
    %150 = vmatprep.subr.mxu0 0.0
    %151 = vmatpush1.msra.mxu0 %v143
    %152 = vmatprep.subr.mxu0 0.0
    %153 = vmatpush1.msra.mxu0 0.0
    %154 = vmatprep.subr.mxu0 0.0
    %155 = vmatpush1.msra.mxu0 0.0
    %156 = vmatprep.subr.mxu0 0.0
    %157 = vmatpush1.msra.mxu0 0.0
    %158 = vmatprep.subr.mxu0 0.0
    %159 = vmatpush1.msra.mxu0 0.0
    %160 = vmatprep.subr.mxu0 0.0
    %161 = vmatpush1.msra.mxu0 0.0
    %162 = vmatprep.subr.mxu0 0.0
    %163 = vmatpush1.msra.mxu0 0.0
    %164 = vmatprep.subr.mxu0 0.0
    %165 = vmatpush1.msra.mxu0 0.0
    %166 = vmatprep.subr.mxu0 0.0
    %167 = vmatpush1.msra.mxu0 0.0
    %168 = vmatprep.subr.mxu0 0.0
    %169 = vmatpush1.msra.mxu0 0.0
    %170 = vmatprep.subr.mxu0 0.0
    %171 = vmatpush1.msra.mxu0 0.0
    %172 = vmatprep.subr.mxu0 0.0
    %173 = vmatpush1.msra.mxu0 0.0
    %174 = vmatprep.subr.mxu0 0.0
    %175 = vmatpush1.msra.mxu0 0.0
    %176 = vmatprep.subr.mxu0 0.0
    %177 = vmatpush1.msra.mxu0 0.0
    %178 = vmatprep.subr.mxu0 0.0
    %179 = vmatpush1.msra.mxu0 0.0
    %180 = vmatprep.subr.mxu0 0.0
    %181 = vmatpush1.msra.mxu0 0.0
    %182 = vmatprep.subr.mxu0 0.0
    %183 = vmatpush1.msra.mxu0 0.0
    %184 = vmatprep.subr.mxu0 0.0
    %185 = vmatpush1.msra.mxu0 0.0
    %186 = vmatprep.subr.mxu0 0.0
    %187 = vmatpush1.msra.mxu0 0.0
    %188 = vmatprep.subr.mxu0 0.0
    %189 = vmatpush1.msra.mxu0 0.0
    %190 = vmatprep.subr.mxu0 0.0
    %191 = vmatpush1.msra.mxu0 0.0
    %192 = vmatprep.subr.mxu0 0.0
    %193 = vmatpush1.msra.mxu0 0.0
    %194 = vmatprep.subr.mxu0 0.0
    %195 = vmatpush1.msra.mxu0 0.0
    %196 = vmatprep.subr.mxu0 0.0
    %197 = vmatpush1.msra.mxu0 0.0
    %198 = vmatprep.subr.mxu0 0.0
    %199 = vmatpush1.msra.mxu0 0.0
    %200 = vmatprep.subr.mxu0 0.0
    %201 = vmatpush1.msra.mxu0 0.0
    %202 = vmatprep.subr.mxu0 0.0
    %203 = vmatpush1.msra.mxu0 0.0
    %204 = vmatprep.subr.mxu0 0.0
    %205 = vmatpush1.msra.mxu0 0.0
    %206 = vmatprep.subr.mxu0 0.0
    %207 = vmatpush1.msra.mxu0 0.0
    %208 = vmatprep.subr.mxu0 0.0
    %209 = vmatpush1.msra.mxu0 0.0
    %210 = vmatprep.subr.mxu0 0.0
    %211 = vmatpush1.msra.mxu0 0.0
    %212 = vmatprep.mubr.f32.mxu0 0.0
    %213 = vmatmul.mubr.f32.gmra.mrb[0].mxu0 %v146
    %v214 = vpop.f32.mrb[0].mxu0
    %v215 = vadd.f32 0.0, %v214
    %v216 = vpop.f32.mrb[0].mxu0
    %217 = vdwg.mxu0
    %v218 = vmul.f32 %v215, %v130
    %219 = vst [vmem:[#allocation7] sm:$0xff] %v218
    // Predicated region
    $region30: #{tpu_custom_call.1} parent=1 // pred_check
      _
    $region31: #{tpu_custom_call.1} parent=1 // pred_check_branch
      %221 = sbr.rel (0) target = $region33
    $region32: #{tpu_custom_call.1} parent=1 // pred_region
      %s223 = ssub.s32 128, 128
      %224 = vsyncadd [#allocation4], %s223
      %s226 = sshll.u32 [#allocation7], 4
      %s227 = int_to_ptr.vmem [resolvable:$true] %s226
      %229 = dma.vmem_to_hbm [thread:$0]  %s227, 128, %s5, [#allocation4]
    $region33: #{tpu_custom_call.1} parent=1 // pred_fallthru
      _
    // Predicated region
    $region34: #{tpu_custom_call.1} parent=1 // pred_check
      _
    $region35: #{tpu_custom_call.1} parent=1 // pred_check_branch
      %231 = sbr.rel (0) target = $region37
    $region36: #{tpu_custom_call.1} parent=1 // pred_region
      %232 = dma.done [#allocation4], 128
    $region37: #{tpu_custom_call.1} parent=1 // pred_fallthru
      _
    %233 = vsyncpa [#allocation3], 1
    %234 = vsyncpa [#allocation6], 1
    %235 = vsyncpa [#allocation4], 1

</llo_original>
